<compile_context>
chip_gen: v7x
topology: tpu7x:2x2x1
jax: 0.10.0
libtpu: 0.0.40
codegen_flags: <defaults>
</compile_context>

<pallas_src>
from functools import partial

import jax
import jax.numpy as jnp
from jax.experimental import pallas as pl
from jax.experimental.pallas import tpu as pltpu


# ---------------------------------------------------------------------------
# Tunables (bytes)
# ---------------------------------------------------------------------------
_FUSED_MAX_BYTES = 2 << 20     # fused single-kernel fast path threshold
_STATS_BLOCK_BYTES = 12 << 20  # stats pass streams only x (Buffered(3) ~ 36 MiB)
_NORM_BLOCK_BYTES = 10 << 20   # norm pass streams x and y (4 buffers ~ 40 MiB)
_VMEM_LIMIT_BYTES = 48 << 20   # explicit scoped-VMEM limit, safe on v5e/v6e/v7x


# ---------------------------------------------------------------------------
# Pallas kernels
# ---------------------------------------------------------------------------
def _fused_bn_kernel(x_ref, gamma_ref, beta_ref, y_ref, mean_ref, var_ref, *,
                     count, eps):
    """Small-tensor fast path: exact two-pass stats + normalize, X resident."""
    x = x_ref[...].astype(jnp.float32)                               # (N, C, HW)
    s = jnp.sum(jnp.sum(x, axis=2, keepdims=True), axis=0, keepdims=True)
    mean = s * (1.0 / count)                                         # (1, C, 1)
    xc = x - mean
    v = jnp.sum(jnp.sum(xc * xc, axis=2, keepdims=True), axis=0, keepdims=True)
    var = v * (1.0 / count)                                          # (1, C, 1)
    scale = gamma_ref[...] * jax.lax.rsqrt(var + eps)
    y_ref[...] = (xc * scale + beta_ref[...]).astype(y_ref.dtype)
    mean_ref[...] = mean
    var_ref[...] = var


def _stats_kernel(x_ref, sum_ref, sumsq_ref, *, lanes, n_total, hw_total,
                  mask_n, mask_m):
    """Accumulate per-(n,c)-tile partial sum(x)/sum(x*x), keeping `lanes` lanes."""
    @pl.when(pl.program_id(2) == 0)
    def _init():
        sum_ref[...] = jnp.zeros_like(sum_ref)
        sumsq_ref[...] = jnp.zeros_like(sumsq_ref)

    x = x_ref[...].astype(jnp.float32)                               # (tn, tc, tm)
    tn, tc, tm = x.shape
    if mask_n or mask_m:                                             # ragged tiles
        valid = None
        if mask_n:
            nid = jax.lax.broadcasted_iota(jnp.int32, x.shape, 0)
            valid = nid < (n_total - pl.program_id(0) * tn)
        if mask_m:
            mid = jax.lax.broadcasted_iota(jnp.int32, x.shape, 2)
            vm = mid < (hw_total - pl.program_id(2) * tm)
            valid = vm if valid is None else jnp.logical_and(valid, vm)
        x = jnp.where(valid, x, 0.0)

    xr = x.reshape(tn, tc, tm // lanes, lanes)                       # lane-preserving
    x2r = xr * xr
    sum_ref[...] += jnp.sum(jnp.sum(xr, axis=2), axis=0, keepdims=True)
    sumsq_ref[...] += jnp.sum(jnp.sum(x2r, axis=2), axis=0, keepdims=True)


def _norm_kernel(x_ref, scale_ref, bias_ref, y_ref):
    """y = x * scale + bias, per-channel params broadcast over the tile."""
    x = x_ref[...].astype(jnp.float32)
    y_ref[...] = (x * scale_ref[...] + bias_ref[...]).astype(y_ref.dtype)


# ---------------------------------------------------------------------------
# Tiling helper: (tn, tc, tm) block of x = (N, C, HW)
# ---------------------------------------------------------------------------
def _choose_tiles(N, C, HW, itemsize, max_block_bytes):
    elems = max(1, max_block_bytes // itemsize)
    sub = {4: 8, 2: 16, 1: 32}.get(itemsize, 8)      # sublane quantum per dtype

    # Lane (last) dim: as long as possible, 128-aligned, unless HW < 128.
    # TODO(synk): HW < 128 (e.g. 7x7=49) keeps a sub-128 lane dim; a one-time
    # pad of HW would improve lane density but costs extra HBM traffic.
    if HW < 128:
        tm = HW
    else:
        hw_floor = (HW // 128) * 128
        min_tc = C if C < sub else sub
        cap = max(128, ((elems // max(1, min_tc)) // 128) * 128)
        tm = min(hw_floor, cap)

    # Channel dim: full C if it fits, else a multiple of the sublane quantum.
    if C * tm <= elems or C <= sub:
        tc = C
    else:
        tc = min(C, max(sub, ((elems // tm) // sub) * sub))
        if tc != C and tc % sub != 0:
            tc = C

    # Batch dim: fill the remaining budget.
    tn = max(1, min(N, elems // max(1, tc * tm)))
    return tn, tc, tm


# ---------------------------------------------------------------------------
# Wrapper: MyBatchNorm2d.forward (training and eval paths of `batch_norm`)
# ---------------------------------------------------------------------------
def my_batch_norm2d_forward(X, gamma, beta, running_mean, running_var,
                            eps=1e-5, momentum=0.1, training=True):
    # TODO(synk): only the 4-D branch of `batch_norm` is implemented (MyBatchNorm2d).
    N, C, H, W = X.shape
    HW = H * W
    itemsize = jnp.dtype(X.dtype).itemsize
    total_bytes = N * C * HW * itemsize
    x3 = X.reshape(N, C, HW)                          # free view, no transpose

    gamma_f = gamma.astype(jnp.float32)
    beta_f = beta.astype(jnp.float32)

    # ---- small-tensor fused fast path (stats + normalize, X read once) ----
    if training and total_bytes <= _FUSED_MAX_BYTES:
        y3, mean_b, var_b = pl.pallas_call(
            partial(_fused_bn_kernel, count=float(N * HW), eps=float(eps)),
            out_shape=(jax.ShapeDtypeStruct((N, C, HW), X.dtype),
                       jax.ShapeDtypeStruct((1, C, 1), jnp.float32),
                       jax.ShapeDtypeStruct((1, C, 1), jnp.float32)),
            compiler_params=pltpu.CompilerParams(
                vmem_limit_bytes=_VMEM_LIMIT_BYTES),
            cost_estimate=pl.CostEstimate(
                flops=6 * N * C * HW, transcendentals=C,
                bytes_accessed=2 * total_bytes + 4 * C * 4),
        )(x3, gamma_f.reshape(1, C, 1), beta_f.reshape(1, C, 1))
        mean = mean_b.reshape(C)
        var = var_b.reshape(C)
        new_rm = (1.0 - momentum) * running_mean + momentum * mean
        new_rv = (1.0 - momentum) * running_var + momentum * var
        return y3.reshape(N, C, H, W), new_rm, new_rv

    if training:
        # ---- pass 1: tiled per-channel stats (megacore-shardable partials) ----
        tn, tc, tm = _choose_tiles(N, C, HW, itemsize, _STATS_BLOCK_BYTES)
        lanes = 128 if tm % 128 == 0 else tm
        gn, gc, gm = pl.cdiv(N, tn), pl.cdiv(C, tc), pl.cdiv(HW, tm)
        mask_n = (N % tn) != 0
        mask_m = (HW % tm) != 0
        psum, psumsq = pl.pallas_call(
            partial(_stats_kernel, lanes=lanes, n_total=N, hw_total=HW,
                    mask_n=mask_n, mask_m=mask_m),
            grid=(gn, gc, gm),
            in_specs=[pl.BlockSpec((tn, tc, tm), lambda n, c, m: (n, c, m),
                                   pipeline_mode=pl.Buffered(3))],
            out_specs=(pl.BlockSpec((1, tc, lanes), lambda n, c, m: (n, c, 0)),
                       pl.BlockSpec((1, tc, lanes), lambda n, c, m: (n, c, 0))),
            out_shape=(jax.ShapeDtypeStruct((gn, C, lanes), jnp.float32),
                       jax.ShapeDtypeStruct((gn, C, lanes), jnp.float32)),
            compiler_params=pltpu.CompilerParams(
                dimension_semantics=("parallel", "parallel", "arbitrary"),
                vmem_limit_bytes=_VMEM_LIMIT_BYTES),
            cost_estimate=pl.CostEstimate(
                flops=3 * N * C * HW, transcendentals=0,
                bytes_accessed=total_bytes + 2 * gn * C * lanes * 4),
        )(x3)
        count = float(N * HW)
        mean = jnp.sum(psum, axis=(0, 2)) / count                    # (C,)
        # TODO(synk): one-pass E[x^2]-E[x]^2 variance in f32; clamp guards the
        # tiny negative values cancellation can produce when |mean| >> std.
        var = jnp.maximum(jnp.sum(psumsq, axis=(0, 2)) / count - mean * mean, 0.0)
        new_rm = (1.0 - momentum) * running_mean + momentum * mean
        new_rv = (1.0 - momentum) * running_var + momentum * var
    else:
        mean = running_mean.astype(jnp.float32)
        var = running_var.astype(jnp.float32)
        new_rm = running_mean
        new_rv = running_var

    # ---- pass 2: tiled elementwise normalize, mean folded into the bias ----
    inv_std = jax.lax.rsqrt(var + eps)
    scale = gamma_f * inv_std
    bias = beta_f - mean * scale
    tn2, tc2, tm2 = _choose_tiles(N, C, HW, itemsize, _NORM_BLOCK_BYTES)
    grid2 = (pl.cdiv(N, tn2), pl.cdiv(C, tc2), pl.cdiv(HW, tm2))
    y3 = pl.pallas_call(
        _norm_kernel,
        grid=grid2,
        in_specs=[pl.BlockSpec((tn2, tc2, tm2), lambda n, c, m: (n, c, m)),
                  pl.BlockSpec((1, tc2, 1), lambda n, c, m: (0, c, 0)),
                  pl.BlockSpec((1, tc2, 1), lambda n, c, m: (0, c, 0))],
        out_specs=pl.BlockSpec((tn2, tc2, tm2), lambda n, c, m: (n, c, m)),
        out_shape=jax.ShapeDtypeStruct((N, C, HW), X.dtype),
        compiler_params=pltpu.CompilerParams(
            dimension_semantics=("parallel", "parallel", "parallel"),
            vmem_limit_bytes=_VMEM_LIMIT_BYTES),
        cost_estimate=pl.CostEstimate(
            flops=2 * N * C * HW, transcendentals=0,
            bytes_accessed=2 * total_bytes + 2 * C * 4),
    )(x3, scale.reshape(1, C, 1), bias.reshape(1, C, 1))

    return y3.reshape(N, C, H, W), new_rm, new_rv


# ---------------------------------------------------------------------------
# Pure-JAX reference mirroring the PyTorch `batch_norm` (training path)
# ---------------------------------------------------------------------------
def _reference(X, gamma, beta, rm, rv, eps, momentum):
    mean = X.mean(axis=(0, 2, 3))
    var = ((X - mean.reshape(1, -1, 1, 1)) ** 2).mean(axis=(0, 2, 3))
    X_hat = (X - mean.reshape(1, -1, 1, 1)) / jnp.sqrt(var + eps).reshape(1, -1, 1, 1)
    Y = gamma.reshape(1, -1, 1, 1) * X_hat + beta.reshape(1, -1, 1, 1)
    rm2 = (1.0 - momentum) * rm + momentum * mean
    rv2 = (1.0 - momentum) * rv + momentum * var
    return Y, rm2, rv2


if __name__ == "__main__":
    key = jax.random.PRNGKey(0)
    eps, momentum = 1e-5, 0.1

    # ---- 1) small shape -> fused single-kernel fast path ----
    N, C, H, W = 2, 4, 16, 16
    k1, k2, k3, key = jax.random.split(key, 4)
    X = 0.3 + jax.random.normal(k1, (N, C, H, W), dtype=jnp.float32)
    gamma = 1.0 + 0.1 * jax.random.normal(k2, (C,), dtype=jnp.float32)
    beta = 0.1 * jax.random.normal(k3, (C,), dtype=jnp.float32)
    rm = jnp.zeros((C,), jnp.float32)
    rv = jnp.ones((C,), jnp.float32)

    Y, nrm, nrv = my_batch_norm2d_forward(X, gamma, beta, rm, rv, eps, momentum, True)
    jax.block_until_ready((Y, nrm, nrv))
    Yr, rmr, rvr = _reference(X, gamma, beta, rm, rv, eps, momentum)
    assert Y.shape == (N, C, H, W)
    assert jnp.allclose(Y, Yr, atol=1e-4, rtol=1e-4)
    assert jnp.allclose(nrm, rmr, atol=1e-5, rtol=1e-5)
    assert jnp.allclose(nrv, rvr, atol=1e-5, rtol=1e-5)

    # eval path (running-stats normalize only)
    Ye, _, _ = my_batch_norm2d_forward(X, gamma, beta, rm, rv, eps, momentum, False)
    jax.block_until_ready(Ye)
    Xh = (X - rm.reshape(1, C, 1, 1)) / jnp.sqrt(rv.reshape(1, C, 1, 1) + eps)
    Ye_ref = gamma.reshape(1, C, 1, 1) * Xh + beta.reshape(1, C, 1, 1)
    assert jnp.allclose(Ye, Ye_ref, atol=1e-4, rtol=1e-4)

    # ---- 2) larger ragged-HW shape -> tiled two-pass path (masked last tile) ----
    N, C, H, W = 8, 32, 56, 56          # HW = 3136, NOT a multiple of 128
    k1, k2, k3, key = jax.random.split(key, 4)
    X = 0.5 + jax.random.normal(k1, (N, C, H, W), dtype=jnp.float32)
    gamma = 1.0 + 0.1 * jax.random.normal(k2, (C,), dtype=jnp.float32)
    beta = 0.1 * jax.random.normal(k3, (C,), dtype=jnp.float32)
    rm = jnp.zeros((C,), jnp.float32)
    rv = jnp.ones((C,), jnp.float32)

    Y, nrm, nrv = my_batch_norm2d_forward(X, gamma, beta, rm, rv, eps, momentum, True)
    jax.block_until_ready((Y, nrm, nrv))
    Yr, rmr, rvr = _reference(X, gamma, beta, rm, rv, eps, momentum)
    assert jnp.allclose(Y, Yr, atol=2e-3, rtol=2e-3)
    assert jnp.allclose(nrm, rmr, atol=1e-4, rtol=1e-4)
    assert jnp.allclose(nrv, rvr, atol=1e-4, rtol=1e-4)

    print("KERNEL_OK")
</pallas_src>

<mosaic_0001>
module attributes {stable_mosaic.version = 11 : i64} {
  func.func @_fused_bn_kernel(%arg0: memref<2x4x256xf32, #tpu.memory_space<vmem>>, %arg1: memref<1x4x1xf32, #tpu.memory_space<vmem>>, %arg2: memref<1x4x1xf32, #tpu.memory_space<vmem>>, %arg3: memref<2x4x256xf32, #tpu.memory_space<vmem>>, %arg4: memref<1x4x1xf32, #tpu.memory_space<vmem>>, %arg5: memref<1x4x1xf32, #tpu.memory_space<vmem>>) attributes {dimension_semantics = [], scalar_prefetch = 0 : i64, scratch_operands = 0 : i64, tpu.core_type = #tpu.core_type<tc>} {
    %c0 = arith.constant 0 : index
    %c0_0 = arith.constant 0 : index
    %c0_1 = arith.constant 0 : index
    %0 = vector.load %arg0[%c0, %c0_0, %c0_1] : memref<2x4x256xf32, #tpu.memory_space<vmem>>, vector<2x4x256xf32>
    %cst = arith.constant dense<0.000000e+00> : vector<2x4xf32>
    %1 = vector.multi_reduction <add>, %0, %cst [2] : vector<2x4x256xf32> to vector<2x4xf32>
    %2 = vector.shape_cast %1 : vector<2x4xf32> to vector<2x4x1xf32>
    %cst_2 = arith.constant dense<0.000000e+00> : vector<4x1xf32>
    %3 = vector.multi_reduction <add>, %2, %cst_2 [0] : vector<2x4x1xf32> to vector<4x1xf32>
    %4 = vector.shape_cast %3 : vector<4x1xf32> to vector<1x4x1xf32>
    %cst_3 = arith.constant 0.001953125 : f32
    %5 = vector.broadcast %cst_3 : f32 to vector<1x4x1xf32>
    %6 = arith.mulf %4, %5 : vector<1x4x1xf32>
    %7 = vector.broadcast %6 : vector<1x4x1xf32> to vector<2x4x256xf32>
    %8 = arith.subf %0, %7 : vector<2x4x256xf32>
    %9 = arith.mulf %8, %8 : vector<2x4x256xf32>
    %cst_4 = arith.constant dense<0.000000e+00> : vector<2x4xf32>
    %10 = vector.multi_reduction <add>, %9, %cst_4 [2] : vector<2x4x256xf32> to vector<2x4xf32>
    %11 = vector.shape_cast %10 : vector<2x4xf32> to vector<2x4x1xf32>
    %cst_5 = arith.constant dense<0.000000e+00> : vector<4x1xf32>
    %12 = vector.multi_reduction <add>, %11, %cst_5 [0] : vector<2x4x1xf32> to vector<4x1xf32>
    %13 = vector.shape_cast %12 : vector<4x1xf32> to vector<1x4x1xf32>
    %cst_6 = arith.constant 0.001953125 : f32
    %14 = vector.broadcast %cst_6 : f32 to vector<1x4x1xf32>
    %15 = arith.mulf %13, %14 : vector<1x4x1xf32>
    %c0_7 = arith.constant 0 : index
    %c0_8 = arith.constant 0 : index
    %c0_9 = arith.constant 0 : index
    %16 = vector.load %arg1[%c0_7, %c0_8, %c0_9] : memref<1x4x1xf32, #tpu.memory_space<vmem>>, vector<1x4x1xf32>
    %cst_10 = arith.constant 9.99999974E-6 : f32
    %17 = vector.broadcast %cst_10 : f32 to vector<1x4x1xf32>
    %18 = arith.addf %15, %17 : vector<1x4x1xf32>
    %19 = math.rsqrt %18 : vector<1x4x1xf32>
    %20 = arith.mulf %16, %19 : vector<1x4x1xf32>
    %21 = vector.broadcast %20 : vector<1x4x1xf32> to vector<2x4x256xf32>
    %22 = arith.mulf %8, %21 : vector<2x4x256xf32>
    %c0_11 = arith.constant 0 : index
    %c0_12 = arith.constant 0 : index
    %c0_13 = arith.constant 0 : index
    %23 = vector.load %arg2[%c0_11, %c0_12, %c0_13] : memref<1x4x1xf32, #tpu.memory_space<vmem>>, vector<1x4x1xf32>
    %24 = vector.broadcast %23 : vector<1x4x1xf32> to vector<2x4x256xf32>
    %25 = arith.addf %22, %24 : vector<2x4x256xf32>
    %c0_14 = arith.constant 0 : index
    %c0_15 = arith.constant 0 : index
    %c0_16 = arith.constant 0 : index
    %26 = vector.load %arg3[%c0_14, %c0_15, %c0_16] : memref<2x4x256xf32, #tpu.memory_space<vmem>>, vector<2x4x256xf32>
    tpu.vector_store %arg3[%c0_14, %c0_15, %c0_16], %25 {strides = array<i32>} : memref<2x4x256xf32, #tpu.memory_space<vmem>>, vector<2x4x256xf32>,
    %c0_17 = arith.constant 0 : index
    %c0_18 = arith.constant 0 : index
    %c0_19 = arith.constant 0 : index
    %27 = vector.load %arg4[%c0_17, %c0_18, %c0_19] : memref<1x4x1xf32, #tpu.memory_space<vmem>>, vector<1x4x1xf32>
    tpu.vector_store %arg4[%c0_17, %c0_18, %c0_19], %6 {strides = array<i32>} : memref<1x4x1xf32, #tpu.memory_space<vmem>>, vector<1x4x1xf32>,
    %c0_20 = arith.constant 0 : index
    %c0_21 = arith.constant 0 : index
    %c0_22 = arith.constant 0 : index
    %28 = vector.load %arg5[%c0_20, %c0_21, %c0_22] : memref<1x4x1xf32, #tpu.memory_space<vmem>>, vector<1x4x1xf32>
    tpu.vector_store %arg5[%c0_20, %c0_21, %c0_22], %15 {strides = array<i32>} : memref<1x4x1xf32, #tpu.memory_space<vmem>>, vector<1x4x1xf32>,
    return
  }
}

</mosaic_0001>

<llo_original>
// kernel: tpu_custom_call.1
$region0: #{tpu_custom_call.1}
  #allocation0 [shape = 'u32[]', space=smem, size = 0x4, offset = 0x4, fixed_abs, tag = 'smem constant byte address 0x4 - core index']
  #allocation1 [shape = 'u32[144,128]{1,0:T(1,128)}', space=vmem, size = 0x12000, scoped, tag = 'internal scratch']
  %s0 = inlined_call_operand.hbm [shape: f32[2,4,256], index: 0, kind: input, shape index: {}]
  %s1 = inlined_call_operand.vmem [shape: f32[1,4,1], index: 1, kind: input, shape index: {}]
  %s2 = inlined_call_operand.vmem [shape: f32[1,4,1], index: 2, kind: input, shape index: {}]
  %s3 = inlined_call_operand.hbm [shape: f32[2,4,256], index: 3, kind: output, shape index: {0}]
  %s4 = inlined_call_operand.vmem [shape: f32[1,4,1], index: 4, kind: output, shape index: {1}]
  %s5 = inlined_call_operand.vmem [shape: f32[1,4,1], index: 5, kind: output, shape index: {2}]
  %6 = xla_tuple %s3, %s4, %s5
  %s7 = sld [smem:[#allocation0]]
  $region42: #{tpu_custom_call.1} parent=0
    _
  %s9 = ssub.s32 1, %s7
  %s10 = scalar_select 0, %s9, %s7
  $region1: #{tpu_custom_call.1} parent=0
    #allocation2 [shape = 'u8[8192]{0}', space=vmem, size = 0x2000, scoped, tag = 'input window, operand 0, single buffered']
    #allocation3 [shape = 's32[1]{0}', space=sflag, size = 0x4, scoped, tag = 'scoped memory for tpu_custom_call.1']
    #allocation4 [shape = 's32[1]{0}', space=sflag, size = 0x4, scoped, tag = 'scoped memory for tpu_custom_call.1']
    #allocation5 [shape = 'u8[8192]{0}', space=vmem, size = 0x2000, scoped, tag = 'output window, operand 0, single buffered']
    %11 = vsyncpa [#allocation3], 0
    %12 = vsyncpa [#allocation4], 0
    // Predicated region
    $region2: #{tpu_custom_call.1} parent=1 // pred_check
      _
    $region3: #{tpu_custom_call.1} parent=1 // pred_check_branch
      %14 = sbr.rel (0) target = $region5
    $region4: #{tpu_custom_call.1} parent=1 // pred_region
      %s16 = ssub.s32 256, 256
      %17 = vsyncadd [#allocation3], %s16
      %s18 = sshll.u32 [#allocation2], 4
      %s19 = int_to_ptr.vmem [resolvable:$true] %s18
      %24 = dma.hbm_to_vmem [thread:$0]  %s0, 256, %s19, [#allocation3], 128, 128, 8
    $region5: #{tpu_custom_call.1} parent=1 // pred_fallthru
      _
    // Predicated region
    $region6: #{tpu_custom_call.1} parent=1 // pred_check
      _
    $region7: #{tpu_custom_call.1} parent=1 // pred_check_branch
      %26 = sbr.rel (0) target = $region9
    $region8: #{tpu_custom_call.1} parent=1 // pred_region
      _
    $region9: #{tpu_custom_call.1} parent=1 // pred_fallthru
      _
    // Predicated region
    $region10: #{tpu_custom_call.1} parent=1 // pred_check
      _
    $region11: #{tpu_custom_call.1} parent=1 // pred_check_branch
      %28 = sbr.rel (0) target = $region13
    $region12: #{tpu_custom_call.1} parent=1 // pred_region
      _
    $region13: #{tpu_custom_call.1} parent=1 // pred_fallthru
      _
    // Predicated region
    $region14: #{tpu_custom_call.1} parent=1 // pred_check
      _
    $region15: #{tpu_custom_call.1} parent=1 // pred_check_branch
      %30 = sbr.rel (0) target = $region17
    $region16: #{tpu_custom_call.1} parent=1 // pred_region
      %31 = dma.done [#allocation3], 256
    $region17: #{tpu_custom_call.1} parent=1 // pred_fallthru
      _
    %v32 = vld [vmem:[#allocation2] sm:$0xff]
    %v33 = vld [vmem:[#allocation2 + $0x8] sm:$0xff]
    %v36 = vcombine.high %v32, %v32
    %v37 = vcombine.high %v33, %v33
    %vm40 = vcmask 1043456
    %v41 = vsel %vm40, %v32, 0.0
    %v42 = vsel %vm40, %v36, 0.0
    %v43 = vadd.f32 %v41, %v42
    %44 = vadd.xlane.f32.xlu0 %v43
    %v45 = vpop.xlane.xlu0 %44
    %v46 = vsel %vm40, %v33, 0.0
    %v47 = vsel %vm40, %v37, 0.0
    %v48 = vadd.f32 %v46, %v47
    %49 = vadd.xlane.f32.xlu0 %v48
    %v50 = vpop.xlane.xlu0 %49
    %v51 = vsel %vm40, %v45, 0.0
    %v52 = vsel %vm40, %v50, 0.0
    %v53 = vadd.f32 %v51, %v52
    %v54 = vmul.f32 %v53, 0.001953125
    %v57 = vunpack.c.l.s4 839922192
    %v58 = vunpack.c.0.s8 %v57
    %v59 = vlaneseq
    %v60 = vshrl.u32 %v59, 7
    %v61 = vsub.s32 %v58, %v60
    %v62 = vrot.slane %v54, %v61
    %v64 = vsub.f32 %v32, %v62
    %v65 = vsub.f32 %v33, %v62
    %v66 = vmul.f32 %v64, %v64
    %v67 = vmul.f32 %v65, %v65
    %v70 = vcombine.high %v66, %v66
    %v71 = vcombine.high %v67, %v67
    %v74 = vsel %vm40, %v66, 0.0
    %v75 = vsel %vm40, %v70, 0.0
    %v76 = vadd.f32 %v74, %v75
    %77 = vadd.xlane.f32.xlu0 %v76
    %v78 = vpop.xlane.xlu0 %77
    %v79 = vsel %vm40, %v67, 0.0
    %v80 = vsel %vm40, %v71, 0.0
    %v81 = vadd.f32 %v79, %v80
    %82 = vadd.xlane.f32.xlu0 %v81
    %v83 = vpop.xlane.xlu0 %82
    %v84 = vsel %vm40, %v78, 0.0
    %v85 = vsel %vm40, %v83, 0.0
    %v86 = vadd.f32 %v84, %v85
    %v87 = vmul.f32 %v86, 0.001953125
    %v88 = vld [vmem:[%s1] sm:$0xf]
    %v89 = vadd.f32 %v87, 1e-05
    %v90 = vrsqrt.pop %v89
    %v91 = vmul.f32 %v88, %v90
    %93 = vset.pattern.permute.xlu0 0
    %94 = vperm.xlu0 %93, %v91
    %v95 = vpop.permute.xlu0 %94
    %v97 = vunpack.c.l.s4 839922192
    %v98 = vunpack.c.0.s8 %v97
    %v99 = vlaneseq
    %v100 = vshrl.u32 %v99, 7
    %v101 = vsub.s32 %v98, %v100
    %v102 = vrot.slane %v95, %v101
    %v104 = vmul.f32 %v64, %v102
    %v105 = vmul.f32 %v65, %v102
    %v106 = vld [vmem:[%s2] sm:$0xf]
    %108 = vset.pattern.permute.xlu0 0
    %109 = vperm.xlu0 %108, %v106
    %v110 = vpop.permute.xlu0 %109
    %v112 = vunpack.c.l.s4 839922192
    %v113 = vunpack.c.0.s8 %v112
    %v114 = vlaneseq
    %v115 = vshrl.u32 %v114, 7
    %v116 = vsub.s32 %v113, %v115
    %v117 = vrot.slane %v110, %v116
    %v119 = vadd.f32 %v104, %v117
    %v120 = vadd.f32 %v105, %v117
    %121 = vst [vmem:[#allocation5] sm:$0xff] %v119
    %122 = vst [vmem:[#allocation5 + $0x8] sm:$0xff] %v120
    %vm123 = vcmask 3072
    %124 = vst.msk [vmem:[%s4] sm:$0xf] %vm123, %v54
    %125 = vst.msk [vmem:[%s5] sm:$0xf] %vm123, %v87
    // Predicated region
    $region18: #{tpu_custom_call.1} parent=1 // pred_check
      _
    $region19: #{tpu_custom_call.1} parent=1 // pred_check_branch
      %127 = sbr.rel (0) target = $region21
    $region20: #{tpu_custom_call.1} parent=1 // pred_region
      %s129 = ssub.s32 256, 256
      %130 = vsyncadd [#allocation4], %s129
      %s131 = sshll.u32 [#allocation5], 4
      %s132 = int_to_ptr.vmem [resolvable:$true] %s131
      %137 = dma.vmem_to_hbm [thread:$0]  %s132, 256, %s3, [#allocation4], 128, 128, 8
    $region21: #{tpu_custom_call.1} parent=1 // pred_fallthru
      _
    // Predicated region
    $region22: #{tpu_custom_call.1} parent=1 // pred_check
      _
    $region23: #{tpu_custom_call.1} parent=1 // pred_check_branch
      %139 = sbr.rel (0) target = $region25
    $region24: #{tpu_custom_call.1} parent=1 // pred_region
      _
    $region25: #{tpu_custom_call.1} parent=1 // pred_fallthru
      _
    // Predicated region
    $region26: #{tpu_custom_call.1} parent=1 // pred_check
      _
    $region27: #{tpu_custom_call.1} parent=1 // pred_check_branch
      %141 = sbr.rel (0) target = $region29
    $region28: #{tpu_custom_call.1} parent=1 // pred_region
      _
    $region29: #{tpu_custom_call.1} parent=1 // pred_fallthru
      _
    // Predicated region
    $region30: #{tpu_custom_call.1} parent=1 // pred_check
      _
    $region31: #{tpu_custom_call.1} parent=1 // pred_check_branch
      %143 = sbr.rel (0) target = $region33
    $region32: #{tpu_custom_call.1} parent=1 // pred_region
      %144 = dma.done [#allocation4], 256
    $region33: #{tpu_custom_call.1} parent=1 // pred_fallthru
      _
    // Predicated region
    $region34: #{tpu_custom_call.1} parent=1 // pred_check
      _
    $region35: #{tpu_custom_call.1} parent=1 // pred_check_branch
      %146 = sbr.rel (0) target = $region37
    $region36: #{tpu_custom_call.1} parent=1 // pred_region
      _
    $region37: #{tpu_custom_call.1} parent=1 // pred_fallthru
      _
    // Predicated region
    $region38: #{tpu_custom_call.1} parent=1 // pred_check
      _
    $region39: #{tpu_custom_call.1} parent=1 // pred_check_branch
      %148 = sbr.rel (0) target = $region41
    $region40: #{tpu_custom_call.1} parent=1 // pred_region
      _
    $region41: #{tpu_custom_call.1} parent=1 // pred_fallthru
      _
    %149 = vsyncpa [#allocation3], 1
    %150 = vsyncpa [#allocation4], 1

</llo_original>
